<compile_context>
chip_gen: v6e
topology: v6e:2x2x1
jax: 0.10.0
libtpu: 0.0.40
codegen_flags: <defaults>
</compile_context>

<pallas_src>
import jax
import jax.numpy as jnp
from jax import lax
from jax.experimental import pallas as pl
from jax.experimental.pallas import tpu as pltpu


def _cooc_graph_kernel(x_ref, lab_ref, cooc_bd_ref, off_ref,
                       wqkv_ref, bqkv_ref, wo_ref, bo_ref, out_ref):
    H = x_ref.shape[1]            # hidden_dim (static)
    x = x_ref[...]                # (bt*C, H) row slab

    # One fused projection pass: (bt*C, H) @ (H, 3H padded to 128 lanes).
    # 1/sqrt(H) is already folded into the Q columns / bias in the wrapper.
    qkv = jnp.dot(x, wqkv_ref[...],
                  preferred_element_type=jnp.float32) + bqkv_ref[...]
    q = qkv[:, 0:H]
    k = qkv[:, H:2 * H]
    v = qkv[:, 2 * H:3 * H]

    # Block-diagonal scores: one dense (bt*C, H) x (bt*C, H)^T MXU matmul.
    scores = lax.dot_general(q, k, (((1,), (1,)), ((), ())),
                             preferred_element_type=jnp.float32)   # (R, R)

    # Multiplicative block-diagonal co-occurrence + per-key label mask, then
    # ADDITIVE -1e30 off-block mask so the softmax denominator only sees the
    # keys of the matching batch element.
    scores = scores * cooc_bd_ref[...] * lab_ref[0] + off_ref[...]

    # Numerically stable softmax over the key axis (128-lane dense).
    m = jnp.max(scores, axis=-1, keepdims=True)
    e = jnp.exp(scores - m)
    denom = jnp.sum(e, axis=-1, keepdims=True)
    attn = e * pl.reciprocal(denom, approx=True)

    # Context: (R, R) @ (R, H) — dense contraction over the 128-256 keys.
    ctx = jnp.dot(attn, v, preferred_element_type=jnp.float32)

    # Output projection and direct (bt*C, H) store; wrapper reshapes.
    out = jnp.dot(ctx.astype(wo_ref.dtype), wo_ref[...],
                  preferred_element_type=jnp.float32) + bo_ref[...]
    out_ref[...] = out.astype(out_ref.dtype)


def _choose_batch_tile(B, C, target_lanes=256):
    """Pick the batch tile bt for the block-diagonal attention block.

    bt*C is the key (lane) width of the per-step score block: target 128-256
    lanes so the score matmul / softmax run on dense vregs while keeping the
    block-diagonal FLOP overhead bounded.  Keeps bt*C a multiple of 8 when
    the grid has more than one step (sublane alignment of the (bt*C, H) row
    blocks) and prefers >=2 grid steps when that does not starve the lanes
    (v7x has two TensorCores; the grid axis is marked "parallel")."""
    bt = max(1, target_lanes // max(C, 1))
    bt = min(bt, B)
    if bt == B and B > 1 and (B // 2) * C >= 128:
        bt = (B + 1) // 2                  # give the second core a step
    if bt < B:
        while bt > 1 and (bt * C) % 8 != 0:
            bt -= 1
    return bt


def cooccurrence_graph_forward(x, cooc, params, labels=None, *, mxu_dtype=None):
    """Pallas implementation of CooccurrenceGraph.forward (simplified=False).

    x:      (B, C, H) float32
    cooc:   (C, C)    float32 co-occurrence matrix
    params: dict with wq, bq, wk, bk, wv, bv, wo, bo (torch.nn.Linear layout)
    labels: optional (B, C) labels; None -> no label masking
    mxu_dtype: optional (e.g. jnp.bfloat16) dtype for x / weights on the MXU.
    """
    B, C, H = x.shape
    out_dtype = x.dtype

    if labels is None:
        label_mask = jnp.ones((B, C), dtype=jnp.float32)
    else:
        label_mask = labels.astype(jnp.float32) * 0.8 + 0.2

    bt = _choose_batch_tile(B, C)
    grid_b = pl.cdiv(B, bt)
    Bp = grid_b * bt
    if Bp != B:   # pad batch so it divides evenly; padded rows sliced off.
        x = jnp.concatenate([x, jnp.zeros((Bp - B, C, H), x.dtype)], axis=0)
        label_mask = jnp.concatenate(
            [label_mask, jnp.ones((Bp - B, C), jnp.float32)], axis=0)

    R = bt * C                                   # rows / keys per grid step

    # Flatten batch rows for the fused projection path.
    x2 = x.reshape(Bp * C, H)

    # Fused + pre-transposed QKV weight, softmax scale folded into Q columns,
    # zero-padded to a 128-lane output width.
    scale = jnp.float32(1.0 / (H ** 0.5))
    wqkv = jnp.concatenate(
        [params["wq"].T * scale, params["wk"].T, params["wv"].T], axis=1)
    bqkv = jnp.concatenate(
        [params["bq"] * scale, params["bk"], params["bv"]], axis=0)
    n_pad = (-wqkv.shape[1]) % 128
    if n_pad:
        wqkv = jnp.pad(wqkv, ((0, 0), (0, n_pad)))
        bqkv = jnp.pad(bqkv, (0, n_pad))
    Np = wqkv.shape[1]
    wqkv = wqkv.astype(jnp.float32)
    bqkv = bqkv.astype(jnp.float32).reshape(1, Np)

    wot = params["wo"].T.astype(jnp.float32)
    bo = params["bo"].astype(jnp.float32).reshape(1, H)

    if mxu_dtype is not None:
        x2 = x2.astype(mxu_dtype)
        wqkv = wqkv.astype(mxu_dtype)
        wot = wot.astype(mxu_dtype)

    # Block-diagonal masks (same for every grid step -> DMA'd once):
    #   cooc_bd : co-occurrence tiled on the block diagonal (multiplicative)
    #   offmask : 0 on-block, -1e30 off-block (ADDITIVE, pre-softmax)
    eye_bt = jnp.eye(bt, dtype=jnp.float32)
    cooc_bd = jnp.kron(eye_bt, cooc.astype(jnp.float32))               # (R, R)
    offmask = (jnp.kron(eye_bt, jnp.ones((C, C), jnp.float32)) - 1.0) * 1e30

    # Per-step label mask as a (grid_b, 1, R) row (key-column broadcast).
    lab3 = label_mask.reshape(grid_b, 1, R)

    rep = lambda shape: pl.BlockSpec(shape, lambda b: (0,) * len(shape))

    out2 = pl.pallas_call(
        _cooc_graph_kernel,
        out_shape=jax.ShapeDtypeStruct((Bp * C, H), out_dtype),
        grid_spec=pltpu.PrefetchScalarGridSpec(
            num_scalar_prefetch=0,
            grid=(grid_b,),
            in_specs=[
                pl.BlockSpec((R, H), lambda b: (b, 0)),        # x rows
                pl.BlockSpec((1, 1, R), lambda b: (b, 0, 0)),  # label mask row
                rep((R, R)),                                   # block-diag cooc
                rep((R, R)),                                   # off-block -inf
                rep((H, Np)), rep((1, Np)),                    # fused Wqkv, b
                rep((H, H)), rep((1, H)),                      # WoT, bo
            ],
            out_specs=pl.BlockSpec((R, H), lambda b: (b, 0)),
        ),
        compiler_params=pltpu.CompilerParams(
            dimension_semantics=("parallel",)),
    )(x2, lab3, cooc_bd, offmask, wqkv, bqkv, wot, bo)

    return out2[: B * C].reshape(B, C, H)


def _reference_forward(x, cooc, params, labels=None):
    """Pure-JAX reference mirroring the PyTorch module (simplified=False)."""
    H = x.shape[-1]
    lin = lambda a, w, b: a @ w.T + b
    q = lin(x, params["wq"], params["bq"])
    k = lin(x, params["wk"], params["bk"])
    v = lin(x, params["wv"], params["bv"])
    scores = jnp.einsum("bij,bkj->bik", q, k) / (H ** 0.5)
    scores = scores * cooc[None, :, :]
    if labels is not None:
        scores = scores * (labels.astype(jnp.float32)[:, None, :] * 0.8 + 0.2)
    attn = jax.nn.softmax(scores, axis=-1)
    out = jnp.einsum("bij,bjd->bid", attn, v)
    return lin(out, params["wo"], params["bo"])


if __name__ == "__main__":
    B, C, H = 2, 8, 32   # batch, num_classes, hidden_dim

    key = jax.random.PRNGKey(0)
    keys = jax.random.split(key, 12)

    # Deterministic "randn"-style parameter init (synthetic, no checkpoint).
    params = {
        "wq": jax.random.normal(keys[0], (H, H), jnp.float32) * 0.1,
        "bq": jax.random.normal(keys[1], (H,), jnp.float32) * 0.1,
        "wk": jax.random.normal(keys[2], (H, H), jnp.float32) * 0.1,
        "bk": jax.random.normal(keys[3], (H,), jnp.float32) * 0.1,
        "wv": jax.random.normal(keys[4], (H, H), jnp.float32) * 0.1,
        "bv": jax.random.normal(keys[5], (H,), jnp.float32) * 0.1,
        "wo": jax.random.normal(keys[6], (H, H), jnp.float32) * 0.1,
        "bo": jax.random.normal(keys[7], (H,), jnp.float32) * 0.1,
    }
    # label_embeddings exists in the module but is unused when x is provided.
    # TODO(synk): _apply_class_balancing (scalar Python-loop rebalancing at
    # init/update time) is not part of the forward hot path; the default
    # identity buffer is used here.
    cooc = jnp.eye(C, dtype=jnp.float32)

    x = jax.random.normal(keys[8], (B, C, H), jnp.float32)
    labels = (jax.random.uniform(keys[9], (B, C)) > 0.5).astype(jnp.float32)

    out = cooccurrence_graph_forward(x, cooc, params, labels=labels)
    out = jax.block_until_ready(out)

    ref = _reference_forward(x, cooc, params, labels=labels)
    assert out.shape == (B, C, H)
    # approx=True reciprocal in the softmax introduces ~1e-3-level relative
    # error, so the tolerance is loosened vs. an exact-divide reference.
    assert jnp.allclose(out, ref, atol=2e-3, rtol=2e-3), "mismatch vs reference"

    print("KERNEL_OK")
</pallas_src>

<mosaic_0001>
module attributes {stable_mosaic.version = 11 : i64} {
  func.func @_cooc_graph_kernel(%arg0: i32, %arg1: memref<16x32xf32, #tpu.memory_space<vmem>>, %arg2: memref<1x1x16xf32, #tpu.memory_space<vmem>>, %arg3: memref<16x16xf32, #tpu.memory_space<vmem>>, %arg4: memref<16x16xf32, #tpu.memory_space<vmem>>, %arg5: memref<32x128xf32, #tpu.memory_space<vmem>>, %arg6: memref<1x128xf32, #tpu.memory_space<vmem>>, %arg7: memref<32x32xf32, #tpu.memory_space<vmem>>, %arg8: memref<1x32xf32, #tpu.memory_space<vmem>>, %arg9: memref<16x32xf32, #tpu.memory_space<vmem>>) attributes {dimension_semantics = [#tpu.dimension_semantics<parallel>], iteration_bounds = array<i64: 1>, scalar_prefetch = 0 : i64, scratch_operands = 0 : i64, tpu.core_type = #tpu.core_type<tc>, window_params = [{transform_indices = @transform_0, window_bounds = array<i64: 16, 32>}, {transform_indices = @transform_1, window_bounds = array<i64: 1, 1, 16>}, {pipeline_mode = #tpu.pipeline_mode<synchronous>, transform_indices = @transform_2, window_bounds = array<i64: 16, 16>}, {pipeline_mode = #tpu.pipeline_mode<synchronous>, transform_indices = @transform_3, window_bounds = array<i64: 16, 16>}, {pipeline_mode = #tpu.pipeline_mode<synchronous>, transform_indices = @transform_4, window_bounds = array<i64: 32, 128>}, {pipeline_mode = #tpu.pipeline_mode<synchronous>, transform_indices = @transform_5, window_bounds = array<i64: 1, 128>}, {pipeline_mode = #tpu.pipeline_mode<synchronous>, transform_indices = @transform_6, window_bounds = array<i64: 32, 32>}, {pipeline_mode = #tpu.pipeline_mode<synchronous>, transform_indices = @transform_7, window_bounds = array<i64: 1, 32>}, {transform_indices = @transform_8, window_bounds = array<i64: 16, 32>}]} {
    %c0 = arith.constant 0 : index
    %c0_0 = arith.constant 0 : index
    %0 = vector.load %arg1[%c0, %c0_0] : memref<16x32xf32, #tpu.memory_space<vmem>>, vector<16x32xf32>
    %c0_1 = arith.constant 0 : index
    %c0_2 = arith.constant 0 : index
    %1 = vector.load %arg5[%c0_1, %c0_2] : memref<32x128xf32, #tpu.memory_space<vmem>>, vector<32x128xf32>
    %cst = arith.constant dense<0.000000e+00> : vector<16x128xf32>
    %2 = tpu.matmul %0, %1, %cst {dimension_numbers = #tpu.dot_dimension_numbers<[1], [0], [0], [1], [0, 0, 1, 1], [], []>} : vector<16x32xf32>, vector<32x128xf32>, vector<16x128xf32> -> vector<16x128xf32>
    %c0_3 = arith.constant 0 : index
    %c0_4 = arith.constant 0 : index
    %3 = vector.load %arg6[%c0_3, %c0_4] : memref<1x128xf32, #tpu.memory_space<vmem>>, vector<1x128xf32>
    %4 = vector.broadcast %3 : vector<1x128xf32> to vector<16x128xf32>
    %5 = arith.addf %2, %4 : vector<16x128xf32>
    %6 = vector.extract_strided_slice %5 {offsets = [0, 0], sizes = [16, 32], strides = [1, 1]} : vector<16x128xf32> to vector<16x32xf32>
    %7 = vector.extract_strided_slice %5 {offsets = [0, 32], sizes = [16, 32], strides = [1, 1]} : vector<16x128xf32> to vector<16x32xf32>
    %8 = vector.extract_strided_slice %5 {offsets = [0, 64], sizes = [16, 32], strides = [1, 1]} : vector<16x128xf32> to vector<16x32xf32>
    %cst_5 = arith.constant dense<0.000000e+00> : vector<16x16xf32>
    %9 = tpu.matmul %6, %7, %cst_5 {dimension_numbers = #tpu.dot_dimension_numbers<[1], [1], [0], [0], [0, 0, 1, 0], [], []>} : vector<16x32xf32>, vector<16x32xf32>, vector<16x16xf32> -> vector<16x16xf32>
    %c0_6 = arith.constant 0 : index
    %c0_7 = arith.constant 0 : index
    %10 = vector.load %arg3[%c0_6, %c0_7] : memref<16x16xf32, #tpu.memory_space<vmem>>, vector<16x16xf32>
    %11 = arith.mulf %9, %10 : vector<16x16xf32>
    %c0_8 = arith.constant 0 : index
    %c0_9 = arith.constant 0 : index
    %c0_10 = arith.constant 0 : index
    %12 = vector.load %arg2[%c0_8, %c0_9, %c0_10] : memref<1x1x16xf32, #tpu.memory_space<vmem>>, vector<1x1x16xf32>
    %13 = vector.shape_cast %12 : vector<1x1x16xf32> to vector<1x16xf32>
    %14 = vector.broadcast %13 : vector<1x16xf32> to vector<16x16xf32>
    %15 = arith.mulf %11, %14 : vector<16x16xf32>
    %c0_11 = arith.constant 0 : index
    %c0_12 = arith.constant 0 : index
    %16 = vector.load %arg4[%c0_11, %c0_12] : memref<16x16xf32, #tpu.memory_space<vmem>>, vector<16x16xf32>
    %17 = arith.addf %15, %16 : vector<16x16xf32>
    %cst_13 = arith.constant dense<0xFF800000> : vector<16xf32>
    %18 = vector.multi_reduction <maximumf>, %17, %cst_13 [1] : vector<16x16xf32> to vector<16xf32>
    %19 = vector.shape_cast %18 : vector<16xf32> to vector<16x1xf32>
    %20 = vector.broadcast %19 : vector<16x1xf32> to vector<16x16xf32>
    %21 = arith.subf %17, %20 : vector<16x16xf32>
    %22 = math.exp %21 : vector<16x16xf32>
    %cst_14 = arith.constant dense<0.000000e+00> : vector<16xf32>
    %23 = vector.multi_reduction <add>, %22, %cst_14 [1] : vector<16x16xf32> to vector<16xf32>
    %24 = vector.shape_cast %23 : vector<16xf32> to vector<16x1xf32>
    %25 = tpu.reciprocal %24 {approx = true} : vector<16x1xf32> -> vector<16x1xf32>
    %26 = vector.broadcast %25 : vector<16x1xf32> to vector<16x16xf32>
    %27 = arith.mulf %22, %26 : vector<16x16xf32>
    %cst_15 = arith.constant dense<0.000000e+00> : vector<16x32xf32>
    %28 = tpu.matmul %27, %8, %cst_15 {dimension_numbers = #tpu.dot_dimension_numbers<[1], [0], [0], [1], [0, 0, 1, 1], [], []>} : vector<16x16xf32>, vector<16x32xf32>, vector<16x32xf32> -> vector<16x32xf32>
    %c0_16 = arith.constant 0 : index
    %c0_17 = arith.constant 0 : index
    %29 = vector.load %arg7[%c0_16, %c0_17] : memref<32x32xf32, #tpu.memory_space<vmem>>, vector<32x32xf32>
    %cst_18 = arith.constant dense<0.000000e+00> : vector<16x32xf32>
    %30 = tpu.matmul %28, %29, %cst_18 {dimension_numbers = #tpu.dot_dimension_numbers<[1], [0], [0], [1], [0, 0, 1, 1], [], []>} : vector<16x32xf32>, vector<32x32xf32>, vector<16x32xf32> -> vector<16x32xf32>
    %c0_19 = arith.constant 0 : index
    %c0_20 = arith.constant 0 : index
    %31 = vector.load %arg8[%c0_19, %c0_20] : memref<1x32xf32, #tpu.memory_space<vmem>>, vector<1x32xf32>
    %32 = vector.broadcast %31 : vector<1x32xf32> to vector<16x32xf32>
    %33 = arith.addf %30, %32 : vector<16x32xf32>
    %c0_21 = arith.constant 0 : index
    %c0_22 = arith.constant 0 : index
    %34 = vector.load %arg9[%c0_21, %c0_22] : memref<16x32xf32, #tpu.memory_space<vmem>>, vector<16x32xf32>
    tpu.vector_store %arg9[%c0_21, %c0_22], %33 {strides = array<i32>} : memref<16x32xf32, #tpu.memory_space<vmem>>, vector<16x32xf32>,
    return
  }
  func.func @transform_0(%arg0: i32) -> (i32, i32) {
    %c0_i32 = arith.constant 0 : i32
    %c0_i32_0 = arith.constant 0 : i32
    return %arg0, %c0_i32 : i32, i32
  }
  func.func @transform_1(%arg0: i32) -> (i32, i32, i32) {
    %c0_i32 = arith.constant 0 : i32
    %c0_i32_0 = arith.constant 0 : i32
    %c0_i32_1 = arith.constant 0 : i32
    return %arg0, %c0_i32, %c0_i32_0 : i32, i32, i32
  }
  func.func @transform_2(%arg0: i32) -> (i32, i32) {
    %c0_i32 = arith.constant 0 : i32
    %c0_i32_0 = arith.constant 0 : i32
    %c0_i32_1 = arith.constant 0 : i32
    return %c0_i32, %c0_i32_0 : i32, i32
  }
  func.func @transform_3(%arg0: i32) -> (i32, i32) {
    %c0_i32 = arith.constant 0 : i32
    %c0_i32_0 = arith.constant 0 : i32
    %c0_i32_1 = arith.constant 0 : i32
    return %c0_i32, %c0_i32_0 : i32, i32
  }
  func.func @transform_4(%arg0: i32) -> (i32, i32) {
    %c0_i32 = arith.constant 0 : i32
    %c0_i32_0 = arith.constant 0 : i32
    %c0_i32_1 = arith.constant 0 : i32
    return %c0_i32, %c0_i32_0 : i32, i32
  }
  func.func @transform_5(%arg0: i32) -> (i32, i32) {
    %c0_i32 = arith.constant 0 : i32
    %c0_i32_0 = arith.constant 0 : i32
    %c0_i32_1 = arith.constant 0 : i32
    return %c0_i32, %c0_i32_0 : i32, i32
  }
  func.func @transform_6(%arg0: i32) -> (i32, i32) {
    %c0_i32 = arith.constant 0 : i32
    %c0_i32_0 = arith.constant 0 : i32
    %c0_i32_1 = arith.constant 0 : i32
    return %c0_i32, %c0_i32_0 : i32, i32
  }
  func.func @transform_7(%arg0: i32) -> (i32, i32) {
    %c0_i32 = arith.constant 0 : i32
    %c0_i32_0 = arith.constant 0 : i32
    %c0_i32_1 = arith.constant 0 : i32
    return %c0_i32, %c0_i32_0 : i32, i32
  }
  func.func @transform_8(%arg0: i32) -> (i32, i32) {
    %c0_i32 = arith.constant 0 : i32
    %c0_i32_0 = arith.constant 0 : i32
    return %arg0, %c0_i32 : i32, i32
  }
}

</mosaic_0001>

<llo_original>
// kernel: tpu_custom_call.1
$region0: #{tpu_custom_call.1}
  #allocation0 [shape = 'u32[]', space=smem, size = 0x4, offset = 0x4, fixed_abs, tag = 'smem constant byte address 0x4 - core index']
  #allocation1 [shape = 'u32[144,128]{1,0:T(1,128)}', space=vmem, size = 0x12000, scoped, tag = 'internal scratch']
  %s0 = inlined_call_operand.hbm [shape: f32[16,32], index: 0, kind: input, shape index: {}]
  %s1 = inlined_call_operand.vmem [shape: f32[1,1,16], index: 1, kind: input, shape index: {}]
  %s2 = inlined_call_operand.hbm [shape: f32[16,16], index: 2, kind: input, shape index: {}]
  %s3 = inlined_call_operand.hbm [shape: f32[16,16], index: 3, kind: input, shape index: {}]
  %s4 = inlined_call_operand.hbm [shape: f32[32,128], index: 4, kind: input, shape index: {}]
  %s5 = inlined_call_operand.vmem [shape: f32[1,128], index: 5, kind: input, shape index: {}]
  %s6 = inlined_call_operand.hbm [shape: f32[32,32], index: 6, kind: input, shape index: {}]
  %s7 = inlined_call_operand.vmem [shape: f32[1,32], index: 7, kind: input, shape index: {}]
  %s8 = inlined_call_operand.hbm [shape: f32[16,32], index: 8, kind: output, shape index: {}]
  %s9 = sld [smem:[#allocation0]]
  $region62: #{tpu_custom_call.1} parent=0
    _
  %s11 = ssub.s32 1, %s9
  %s12 = scalar_select 0, %s11, %s9
  $region1: #{tpu_custom_call.1} parent=0
    #allocation2 [shape = 'u8[8192]{0}', space=vmem, size = 0x2000, scoped, tag = 'input window, operand 0, single buffered']
    #allocation3 [shape = 's32[1]{0}', space=sflag, size = 0x4, scoped, tag = 'scoped memory for tpu_custom_call.1']
    #allocation4 [shape = 's32[1]{0}', space=sflag, size = 0x4, scoped, tag = 'scoped memory for tpu_custom_call.1']
    #allocation5 [shape = 'u8[8192]{0}', space=vmem, size = 0x2000, scoped, tag = 'input window, operand 2, single buffered']
    #allocation6 [shape = 's32[1]{0}', space=sflag, size = 0x4, scoped, tag = 'scoped memory for tpu_custom_call.1']
    #allocation7 [shape = 'u8[8192]{0}', space=vmem, size = 0x2000, scoped, tag = 'input window, operand 3, single buffered']
    #allocation8 [shape = 'u8[16384]{0}', space=vmem, size = 0x4000, scoped, tag = 'input window, operand 4, single buffered']
    #allocation9 [shape = 's32[1]{0}', space=sflag, size = 0x4, scoped, tag = 'scoped memory for tpu_custom_call.1']
    #allocation10 [shape = 'u8[16384]{0}', space=vmem, size = 0x4000, scoped, tag = 'input window, operand 6, single buffered']
    #allocation11 [shape = 'u8[8192]{0}', space=vmem, size = 0x2000, scoped, tag = 'output window, operand 0, single buffered']
    %13 = vsyncpa [#allocation3], 0
    %14 = vsyncpa [#allocation6], 0
    %15 = vsyncpa [#allocation9], 0
    %16 = vsyncpa [#allocation4], 0
    // Predicated region
    $region2: #{tpu_custom_call.1} parent=1 // pred_check
      _
    $region3: #{tpu_custom_call.1} parent=1 // pred_check_branch
      %18 = sbr.rel (0) target = $region5
    $region4: #{tpu_custom_call.1} parent=1 // pred_region
      %s20 = ssub.s32 256, 256
      %21 = vsyncadd [#allocation3], %s20
      %s22 = sshll.u32 [#allocation2], 4
      %s23 = int_to_ptr.vmem [resolvable:$true] %s22
      %28 = dma.hbm_to_vmem [thread:$0]  %s0, 256, %s23, [#allocation3], 128, 128, 8
    $region5: #{tpu_custom_call.1} parent=1 // pred_fallthru
      _
    // Predicated region
    $region6: #{tpu_custom_call.1} parent=1 // pred_check
      _
    $region7: #{tpu_custom_call.1} parent=1 // pred_check_branch
      %30 = sbr.rel (0) target = $region9
    $region8: #{tpu_custom_call.1} parent=1 // pred_region
      _
    $region9: #{tpu_custom_call.1} parent=1 // pred_fallthru
      _
    // Predicated region
    $region10: #{tpu_custom_call.1} parent=1 // pred_check
      _
    $region11: #{tpu_custom_call.1} parent=1 // pred_check_branch
      %32 = sbr.rel (0) target = $region13
    $region12: #{tpu_custom_call.1} parent=1 // pred_region
      %s34 = ssub.s32 256, 256
      %35 = vsyncadd [#allocation6], %s34
      %s36 = sshll.u32 [#allocation5], 4
      %s37 = int_to_ptr.vmem [resolvable:$true] %s36
      %42 = dma.hbm_to_vmem [thread:$0]  %s2, 256, %s37, [#allocation6], 128, 128, 8
    $region13: #{tpu_custom_call.1} parent=1 // pred_fallthru
      _
    // Predicated region
    $region14: #{tpu_custom_call.1} parent=1 // pred_check
      _
    $region15: #{tpu_custom_call.1} parent=1 // pred_check_branch
      %44 = sbr.rel (0) target = $region17
    $region16: #{tpu_custom_call.1} parent=1 // pred_region
      %s46 = ssub.s32 256, 256
      %47 = vsyncadd [#allocation6], %s46
      %s48 = sshll.u32 [#allocation7], 4
      %s49 = int_to_ptr.vmem [resolvable:$true] %s48
      %54 = dma.hbm_to_vmem [thread:$0]  %s3, 256, %s49, [#allocation6], 128, 128, 8
    $region17: #{tpu_custom_call.1} parent=1 // pred_fallthru
      _
    // Predicated region
    $region18: #{tpu_custom_call.1} parent=1 // pred_check
      _
    $region19: #{tpu_custom_call.1} parent=1 // pred_check_branch
      %56 = sbr.rel (0) target = $region21
    $region20: #{tpu_custom_call.1} parent=1 // pred_region
      %s58 = ssub.s32 512, 512
      %59 = vsyncadd [#allocation9], %s58
      %s60 = sshll.u32 [#allocation8], 4
      %s61 = int_to_ptr.vmem [resolvable:$true] %s60
      %66 = dma.hbm_to_vmem [thread:$0]  %s4, 512, %s61, [#allocation9], 128, 128, 8
    $region21: #{tpu_custom_call.1} parent=1 // pred_fallthru
      _
    // Predicated region
    $region22: #{tpu_custom_call.1} parent=1 // pred_check
      _
    $region23: #{tpu_custom_call.1} parent=1 // pred_check_branch
      %68 = sbr.rel (0) target = $region25
    $region24: #{tpu_custom_call.1} parent=1 // pred_region
      _
    $region25: #{tpu_custom_call.1} parent=1 // pred_fallthru
      _
    // Predicated region
    $region26: #{tpu_custom_call.1} parent=1 // pred_check
      _
    $region27: #{tpu_custom_call.1} parent=1 // pred_check_branch
      %70 = sbr.rel (0) target = $region29
    $region28: #{tpu_custom_call.1} parent=1 // pred_region
      %s72 = ssub.s32 512, 512
      %73 = vsyncadd [#allocation9], %s72
      %s74 = sshll.u32 [#allocation10], 4
      %s75 = int_to_ptr.vmem [resolvable:$true] %s74
      %80 = dma.hbm_to_vmem [thread:$0]  %s6, 512, %s75, [#allocation9], 128, 128, 8
    $region29: #{tpu_custom_call.1} parent=1 // pred_fallthru
      _
    // Predicated region
    $region30: #{tpu_custom_call.1} parent=1 // pred_check
      _
    $region31: #{tpu_custom_call.1} parent=1 // pred_check_branch
      %82 = sbr.rel (0) target = $region33
    $region32: #{tpu_custom_call.1} parent=1 // pred_region
      _
    $region33: #{tpu_custom_call.1} parent=1 // pred_fallthru
      _
    // Predicated region
    $region34: #{tpu_custom_call.1} parent=1 // pred_check
      _
    $region35: #{tpu_custom_call.1} parent=1 // pred_check_branch
      %84 = sbr.rel (0) target = $region37
    $region36: #{tpu_custom_call.1} parent=1 // pred_region
      %85 = dma.done [#allocation3], 256
    $region37: #{tpu_custom_call.1} parent=1 // pred_fallthru
      _
    // Predicated region
    $region38: #{tpu_custom_call.1} parent=1 // pred_check
      _
    $region39: #{tpu_custom_call.1} parent=1 // pred_check_branch
      %87 = sbr.rel (0) target = $region41
    $region40: #{tpu_custom_call.1} parent=1 // pred_region
      %88 = dma.done [#allocation6], 256
    $region41: #{tpu_custom_call.1} parent=1 // pred_fallthru
      _
    // Predicated region
    $region42: #{tpu_custom_call.1} parent=1 // pred_check
      _
    $region43: #{tpu_custom_call.1} parent=1 // pred_check_branch
      %90 = sbr.rel (0) target = $region45
    $region44: #{tpu_custom_call.1} parent=1 // pred_region
      %91 = dma.done [#allocation6], 256
    $region45: #{tpu_custom_call.1} parent=1 // pred_fallthru
      _
    // Predicated region
    $region46: #{tpu_custom_call.1} parent=1 // pred_check
      _
    $region47: #{tpu_custom_call.1} parent=1 // pred_check_branch
      %93 = sbr.rel (0) target = $region49
    $region48: #{tpu_custom_call.1} parent=1 // pred_region
      %94 = dma.done [#allocation9], 512
    $region49: #{tpu_custom_call.1} parent=1 // pred_fallthru
      _
    // Predicated region
    $region50: #{tpu_custom_call.1} parent=1 // pred_check
      _
    $region51: #{tpu_custom_call.1} parent=1 // pred_check_branch
      %96 = sbr.rel (0) target = $region53
    $region52: #{tpu_custom_call.1} parent=1 // pred_region
      %97 = dma.done [#allocation9], 512
    $region53: #{tpu_custom_call.1} parent=1 // pred_fallthru
      _
    %v98 = vld [vmem:[#allocation2] sm:$0xff]
    %v99 = vld [vmem:[#allocation2 + $0x8] sm:$0xff]
    %v100 = vld [vmem:[#allocation8] sm:$0xff]
    %v101 = vld [vmem:[#allocation8 + $0x8] sm:$0xff]
    %v102 = vld [vmem:[#allocation8 + $0x10] sm:$0xff]
    %v103 = vld [vmem:[#allocation8 + $0x18] sm:$0xff]
    %v104 = vld [vmem:[%s5] sm:$0x1]
    %v106 = vlaneseq
    %v107 = vshrl.u32 %v106, 7
    %v108 = vsub.s32 0, %v107
    %v109 = vrot.slane %v104, %v108
    %vm111 = vcmask 261120
    %v113 = vsel %vm111, %v98, 0
    %v116 = vsel %vm111, %v99, 0
    %118 = vmatprep.subr.mxu0 0.0
    %119 = vmatpush1.msra.mxu0 0.0
    %120 = vmatprep.subr.mxu0 0.0
    %121 = vmatpush1.msra.mxu0 0.0
    %122 = vmatprep.subr.mxu0 0.0
    %123 = vmatpush1.msra.mxu0 0.0
    %124 = vmatprep.subr.mxu0 0.0
    %125 = vmatpush1.msra.mxu0 0.0
    %126 = vmatprep.subr.mxu0 0.0
    %127 = vmatpush1.msra.mxu0 0.0
    %128 = vmatprep.subr.mxu0 0.0
    %129 = vmatpush1.msra.mxu0 0.0
    %130 = vmatprep.subr.mxu0 0.0
    %131 = vmatpush1.msra.mxu0 0.0
    %132 = vmatprep.subr.mxu0 0.0
    %133 = vmatpush1.msra.mxu0 0.0
    %134 = vmatprep.subr.mxu0 0.0
    %135 = vmatpush1.msra.mxu0 0.0
    %136 = vmatprep.subr.mxu0 0.0
    %137 = vmatpush1.msra.mxu0 0.0
    %138 = vmatprep.subr.mxu0 0.0
    %139 = vmatpush1.msra.mxu0 0.0
    %140 = vmatprep.subr.mxu0 0.0
    %141 = vmatpush1.msra.mxu0 0.0
    %142 = vmatprep.subr.mxu0 0.0
    %143 = vmatpush1.msra.mxu0 %v103
    %144 = vmatprep.subr.mxu0 0.0
    %145 = vmatpush1.msra.mxu0 %v102
    %146 = vmatprep.subr.mxu0 0.0
    %147 = vmatpush1.msra.mxu0 %v101
    %148 = vmatprep.subr.mxu0 0.0
    %149 = vmatpush1.msra.mxu0 %v100
    %150 = vmatprep.subr.mxu0 0.0
    %151 = vmatpush2.msra.mxu0 0.0
    %152 = vmatprep.subr.mxu0 0.0
    %153 = vmatpush2.msra.mxu0 0.0
    %154 = vmatprep.subr.mxu0 0.0
    %155 = vmatpush2.msra.mxu0 0.0
    %156 = vmatprep.subr.mxu0 0.0
    %157 = vmatpush2.msra.mxu0 0.0
    %158 = vmatprep.subr.mxu0 0.0
    %159 = vmatpush2.msra.mxu0 0.0
    %160 = vmatprep.subr.mxu0 0.0
    %161 = vmatpush2.msra.mxu0 0.0
    %162 = vmatprep.subr.mxu0 0.0
    %163 = vmatpush2.msra.mxu0 0.0
    %164 = vmatprep.subr.mxu0 0.0
    %165 = vmatpush2.msra.mxu0 0.0
    %166 = vmatprep.subr.mxu0 0.0
    %167 = vmatpush2.msra.mxu0 0.0
    %168 = vmatprep.subr.mxu0 0.0
    %169 = vmatpush2.msra.mxu0 0.0
    %170 = vmatprep.subr.mxu0 0.0
    %171 = vmatpush2.msra.mxu0 0.0
    %172 = vmatprep.subr.mxu0 0.0
    %173 = vmatpush2.msra.mxu0 0.0
    %174 = vmatprep.subr.mxu0 0.0
    %175 = vmatpush2.msra.mxu0 0.0
    %176 = vmatprep.subr.mxu0 0.0
    %177 = vmatpush2.msra.mxu0 0.0
    %178 = vmatprep.subr.mxu0 0.0
    %179 = vmatpush2.msra.mxu0 0.0
    %180 = vmatprep.subr.mxu0 0.0
    %181 = vmatpush2.msra.mxu0 0.0
    %182 = vmatprep.mubr.f32.mxu0 0.0
    %183 = vmatmul.mubr.f32.gmra.mxu0 %v113
    %v184 = vpop.f32.mrf.mxu0
    %v185 = vadd.f32 %v109, %v184
    %v186 = vpop.f32.mrf.mxu0
    %187 = vmatprep.mubr.f32.mxu0 0.0
    %188 = vmatmul.mubr.f32.gmra.mxu0 %v116
    %v189 = vpop.f32.mrf.mxu0
    %v190 = vadd.f32 %v109, %v189
    %v191 = vpop.f32.mrf.mxu0
    %192 = vdwg.mxu0
    %195 = vrot.lane.b32.xlu0 %v185, 96
    %v196 = vpop.permute.xlu0 %195
    %197 = vrot.lane.b32.xlu0 %v190, 96
    %v198 = vpop.permute.xlu0 %197
    %v199 = vsel %vm111, %v185, 0
    %v201 = vsel %vm111, %v190, 0
    %v203 = vsel %vm111, %v196, 0
    %v205 = vsel %vm111, %v198, 0
    %207 = vmatprep.subr.mxu0 0.0
    %208 = vmatpush1.xpose.msra.mxu0 0.0
    %209 = vmatprep.subr.mxu0 0.0
    %210 = vmatpush1.xpose.msra.mxu0 0.0
    %211 = vmatprep.subr.mxu0 0.0
    %212 = vmatpush1.xpose.msra.mxu0 0.0
    %213 = vmatprep.subr.mxu0 0.0
    %214 = vmatpush1.xpose.msra.mxu0 0.0
    %215 = vmatprep.subr.mxu0 0.0
    %216 = vmatpush1.xpose.msra.mxu0 0.0
    %217 = vmatprep.subr.mxu0 0.0
    %218 = vmatpush1.xpose.msra.mxu0 0.0
    %219 = vmatprep.subr.mxu0 0.0
    %220 = vmatpush1.xpose.msra.mxu0 0.0
    %221 = vmatprep.subr.mxu0 0.0
    %222 = vmatpush1.xpose.msra.mxu0 0.0
    %223 = vmatprep.subr.mxu0 0.0
    %224 = vmatpush1.xpose.msra.mxu0 0.0
    %225 = vmatprep.subr.mxu0 0.0
    %226 = vmatpush1.xpose.msra.mxu0 0.0
    %227 = vmatprep.subr.mxu0 0.0
    %228 = vmatpush1.xpose.msra.mxu0 0.0
    %229 = vmatprep.subr.mxu0 0.0
    %230 = vmatpush1.xpose.msra.mxu0 0.0
    %231 = vmatprep.subr.mxu0 0.0
    %232 = vmatpush1.xpose.msra.mxu0 0.0
    %233 = vmatprep.subr.mxu0 0.0
    %234 = vmatpush1.xpose.msra.mxu0 0.0
    %235 = vmatprep.subr.mxu0 0.0
    %236 = vmatpush1.xpose.msra.mxu0 %v205
    %237 = vmatprep.subr.mxu0 0.0
    %238 = vmatpush1.xpose.msra.mxu0 %v203
    %239 = vmatprep.subr.mxu0 0.0
    %240 = vmatpush2.xpose.msra.mxu0 0.0
    %241 = vmatprep.subr.mxu0 0.0
    %242 = vmatpush2.xpose.msra.mxu0 0.0
    %243 = vmatprep.subr.mxu0 0.0
    %244 = vmatpush2.xpose.msra.mxu0 0.0
    %245 = vmatprep.subr.mxu0 0.0
    %246 = vmatpush2.xpose.msra.mxu0 0.0
    %247 = vmatprep.subr.mxu0 0.0
    %248 = vmatpush2.xpose.msra.mxu0 0.0
    %249 = vmatprep.subr.mxu0 0.0
    %250 = vmatpush2.xpose.msra.mxu0 0.0
    %251 = vmatprep.subr.mxu0 0.0
    %252 = vmatpush2.xpose.msra.mxu0 0.0
    %253 = vmatprep.subr.mxu0 0.0
    %254 = vmatpush2.xpose.msra.mxu0 0.0
    %255 = vmatprep.subr.mxu0 0.0
    %256 = vmatpush2.xpose.msra.mxu0 0.0
    %257 = vmatprep.subr.mxu0 0.0
    %258 = vmatpush2.xpose.msra.mxu0 0.0
    %259 = vmatprep.subr.mxu0 0.0
    %260 = vmatpush2.xpose.msra.mxu0 0.0
    %261 = vmatprep.subr.mxu0 0.0
    %262 = vmatpush2.xpose.msra.mxu0 0.0
    %263 = vmatprep.subr.mxu0 0.0
    %264 = vmatpush2.xpose.msra.mxu0 0.0
    %265 = vmatprep.subr.mxu0 0.0
    %266 = vmatpush2.xpose.msra.mxu0 0.0
    %267 = vmatprep.subr.mxu0 0.0
    %268 = vmatpush2.xpose.msra.mxu0 0.0
    %269 = vmatprep.subr.mxu0 0.0
    %270 = vmatpush2.xpose.msra.mxu0 0.0
    %271 = vmatprep.mubr.f32.mxu0 0.0
    %272 = vmatmul.mubr.f32.gmra.mxu0 %v199
    %v273 = vpop.f32.mrf.mxu0
    %v274 = vadd.f32 0.0, %v273
    %v275 = vpop.f32.mrf.mxu0
    %276 = vmatprep.mubr.f32.mxu0 0.0
    %277 = vmatmul.mubr.f32.gmra.mxu0 %v201
    %v278 = vpop.f32.mrf.mxu0
    %v279 = vadd.f32 0.0, %v278
    %v280 = vpop.f32.mrf.mxu0
    %281 = vdwg.mxu0
    %v282 = vld [vmem:[#allocation5] sm:$0xff]
    %v283 = vld [vmem:[#allocation5 + $0x8] sm:$0xff]
    %v284 = vmul.f32 %v274, %v282
    %v285 = vmul.f32 %v279, %v283
    %v286 = vld [vmem:[%s1] sm:$0x1]
    %v288 = vlaneseq
    %v289 = vshrl.u32 %v288, 7
    %v290 = vsub.s32 0, %v289
    %v291 = vrot.slane %v286, %v290
    %v293 = vmul.f32 %v284, %v291
    %v294 = vmul.f32 %v285, %v291
    %v295 = vld [vmem:[#allocation7] sm:$0xff]
    %v296 = vld [vmem:[#allocation7 + $0x8] sm:$0xff]
    %v297 = vadd.f32 %v293, %v295
    %v298 = vadd.f32 %v294, %v296
    %vm299 = vcmask 130048
    %v300 = vsel %vm299, %v297, -inf
    %301 = vmax.xlane.f32.xlu0 %v300
    %v302 = vpop.xlane.xlu0 %301
    %v303 = vsel %vm299, %v298, -inf
    %304 = vmax.xlane.f32.xlu0 %v303
    %v305 = vpop.xlane.xlu0 %304
    %v306 = vsub.f32 %v297, %v302
    %v307 = vsub.f32 %v298, %v305
    %v308 = vmul.f32 %v306, 1.442695
    %v309 = vpow.pop %v308
    %v310 = vmul.f32 %v307, 1.442695
    %v311 = vpow.pop %v310
    %v312 = vsel %vm299, %v309, 0.0
    %313 = vadd.xlane.f32.xlu0 %v312
    %v314 = vpop.xlane.xlu0 %313
    %v315 = vsel %vm299, %v311, 0.0
    %316 = vadd.xlane.f32.xlu0 %v315
    %v317 = vpop.xlane.xlu0 %316
    %v318 = vrcp.pop %v314
    %v319 = vrcp.pop %v317
    %v320 = vmul.f32 %v309, %v318
    %v321 = vmul.f32 %v311, %v319
    %322 = vrot.lane.b32.xlu0 %v185, 64
    %v323 = vpop.permute.xlu0 %322
    %324 = vrot.lane.b32.xlu0 %v190, 64
    %v325 = vpop.permute.xlu0 %324
    %v329 = vsel %vm299, %v320, 0
    %v332 = vsel %vm299, %v321, 0
    %334 = vmatprep.subr.mxu0 0.0
    %335 = vmatpush1.msra.mxu0 0.0
    %336 = vmatprep.subr.mxu0 0.0
    %337 = vmatpush1.msra.mxu0 0.0
    %338 = vmatprep.subr.mxu0 0.0
    %339 = vmatpush1.msra.mxu0 0.0
    %340 = vmatprep.subr.mxu0 0.0
    %341 = vmatpush1.msra.mxu0 0.0
    %342 = vmatprep.subr.mxu0 0.0
    %343 = vmatpush1.msra.mxu0 0.0
    %344 = vmatprep.subr.mxu0 0.0
    %345 = vmatpush1.msra.mxu0 0.0
    %346 = vmatprep.subr.mxu0 0.0
    %347 = vmatpush1.msra.mxu0 0.0
    %348 = vmatprep.subr.mxu0 0.0
    %349 = vmatpush1.msra.mxu0 0.0
    %350 = vmatprep.subr.mxu0 0.0
    %351 = vmatpush1.msra.mxu0 0.0
    %352 = vmatprep.subr.mxu0 0.0
    %353 = vmatpush1.msra.mxu0 0.0
    %354 = vmatprep.subr.mxu0 0.0
    %355 = vmatpush1.msra.mxu0 0.0
    %356 = vmatprep.subr.mxu0 0.0
    %357 = vmatpush1.msra.mxu0 0.0
    %358 = vmatprep.subr.mxu0 0.0
    %359 = vmatpush1.msra.mxu0 0.0
    %360 = vmatprep.subr.mxu0 0.0
    %361 = vmatpush1.msra.mxu0 0.0
    %362 = vmatprep.subr.mxu0 0.0
    %363 = vmatpush1.msra.mxu0 %v325
    %364 = vmatprep.subr.mxu0 0.0
    %365 = vmatpush1.msra.mxu0 %v323
    %366 = vmatprep.subr.mxu0 0.0
    %367 = vmatpush2.msra.mxu0 0.0
    %368 = vmatprep.subr.mxu0 0.0
    %369 = vmatpush2.msra.mxu0 0.0
    %370 = vmatprep.subr.mxu0 0.0
    %371 = vmatpush2.msra.mxu0 0.0
    %372 = vmatprep.subr.mxu0 0.0
    %373 = vmatpush2.msra.mxu0 0.0
    %374 = vmatprep.subr.mxu0 0.0
    %375 = vmatpush2.msra.mxu0 0.0
    %376 = vmatprep.subr.mxu0 0.0
    %377 = vmatpush2.msra.mxu0 0.0
    %378 = vmatprep.subr.mxu0 0.0
    %379 = vmatpush2.msra.mxu0 0.0
    %380 = vmatprep.subr.mxu0 0.0
    %381 = vmatpush2.msra.mxu0 0.0
    %382 = vmatprep.subr.mxu0 0.0
    %383 = vmatpush2.msra.mxu0 0.0
    %384 = vmatprep.subr.mxu0 0.0
    %385 = vmatpush2.msra.mxu0 0.0
    %386 = vmatprep.subr.mxu0 0.0
    %387 = vmatpush2.msra.mxu0 0.0
    %388 = vmatprep.subr.mxu0 0.0
    %389 = vmatpush2.msra.mxu0 0.0
    %390 = vmatprep.subr.mxu0 0.0
    %391 = vmatpush2.msra.mxu0 0.0
    %392 = vmatprep.subr.mxu0 0.0
    %393 = vmatpush2.msra.mxu0 0.0
    %394 = vmatprep.subr.mxu0 0.0
    %395 = vmatpush2.msra.mxu0 0.0
    %396 = vmatprep.subr.mxu0 0.0
    %397 = vmatpush2.msra.mxu0 0.0
    %398 = vmatprep.mubr.f32.mxu0 0.0
    %399 = vmatmul.mubr.f32.gmra.mxu0 %v329
    %v400 = vpop.f32.mrf.mxu0
    %v401 = vadd.f32 0.0, %v400
    %v402 = vpop.f32.mrf.mxu0
    %403 = vmatprep.mubr.f32.mxu0 0.0
    %404 = vmatmul.mubr.f32.gmra.mxu0 %v332
    %v405 = vpop.f32.mrf.mxu0
    %v406 = vadd.f32 0.0, %v405
    %v407 = vpop.f32.mrf.mxu0
    %408 = vdwg.mxu0
    %v409 = vld [vmem:[#allocation10] sm:$0xff]
    %v410 = vld [vmem:[#allocation10 + $0x8] sm:$0xff]
    %v411 = vld [vmem:[#allocation10 + $0x10] sm:$0xff]
    %v412 = vld [vmem:[#allocation10 + $0x18] sm:$0xff]
    %v413 = vld [vmem:[%s7] sm:$0x1]
    %v415 = vlaneseq
    %v416 = vshrl.u32 %v415, 7
    %v417 = vsub.s32 0, %v416
    %v418 = vrot.slane %v413, %v417
    %v421 = vsel %vm111, %v401, 0
    %v424 = vsel %vm111, %v406, 0
    %426 = vmatprep.subr.mxu0 0.0
    %427 = vmatpush1.msra.mxu0 0.0
    %428 = vmatprep.subr.mxu0 0.0
    %429 = vmatpush1.msra.mxu0 0.0
    %430 = vmatprep.subr.mxu0 0.0
    %431 = vmatpush1.msra.mxu0 0.0
    %432 = vmatprep.subr.mxu0 0.0
    %433 = vmatpush1.msra.mxu0 0.0
    %434 = vmatprep.subr.mxu0 0.0
    %435 = vmatpush1.msra.mxu0 0.0
    %436 = vmatprep.subr.mxu0 0.0
    %437 = vmatpush1.msra.mxu0 0.0
    %438 = vmatprep.subr.mxu0 0.0
    %439 = vmatpush1.msra.mxu0 0.0
    %440 = vmatprep.subr.mxu0 0.0
    %441 = vmatpush1.msra.mxu0 0.0
    %442 = vmatprep.subr.mxu0 0.0
    %443 = vmatpush1.msra.mxu0 0.0
    %444 = vmatprep.subr.mxu0 0.0
    %445 = vmatpush1.msra.mxu0 0.0
    %446 = vmatprep.subr.mxu0 0.0
    %447 = vmatpush1.msra.mxu0 0.0
    %448 = vmatprep.subr.mxu0 0.0
    %449 = vmatpush1.msra.mxu0 0.0
    %450 = vmatprep.subr.mxu0 0.0
    %451 = vmatpush1.msra.mxu0 %v412
    %452 = vmatprep.subr.mxu0 0.0
    %453 = vmatpush1.msra.mxu0 %v411
    %454 = vmatprep.subr.mxu0 0.0
    %455 = vmatpush1.msra.mxu0 %v410
    %456 = vmatprep.subr.mxu0 0.0
    %457 = vmatpush1.msra.mxu0 %v409
    %458 = vmatprep.subr.mxu0 0.0
    %459 = vmatpush2.msra.mxu0 0.0
    %460 = vmatprep.subr.mxu0 0.0
    %461 = vmatpush2.msra.mxu0 0.0
    %462 = vmatprep.subr.mxu0 0.0
    %463 = vmatpush2.msra.mxu0 0.0
    %464 = vmatprep.subr.mxu0 0.0
    %465 = vmatpush2.msra.mxu0 0.0
    %466 = vmatprep.subr.mxu0 0.0
    %467 = vmatpush2.msra.mxu0 0.0
    %468 = vmatprep.subr.mxu0 0.0
    %469 = vmatpush2.msra.mxu0 0.0
    %470 = vmatprep.subr.mxu0 0.0
    %471 = vmatpush2.msra.mxu0 0.0
    %472 = vmatprep.subr.mxu0 0.0
    %473 = vmatpush2.msra.mxu0 0.0
    %474 = vmatprep.subr.mxu0 0.0
    %475 = vmatpush2.msra.mxu0 0.0
    %476 = vmatprep.subr.mxu0 0.0
    %477 = vmatpush2.msra.mxu0 0.0
    %478 = vmatprep.subr.mxu0 0.0
    %479 = vmatpush2.msra.mxu0 0.0
    %480 = vmatprep.subr.mxu0 0.0
    %481 = vmatpush2.msra.mxu0 0.0
    %482 = vmatprep.subr.mxu0 0.0
    %483 = vmatpush2.msra.mxu0 0.0
    %484 = vmatprep.subr.mxu0 0.0
    %485 = vmatpush2.msra.mxu0 0.0
    %486 = vmatprep.subr.mxu0 0.0
    %487 = vmatpush2.msra.mxu0 0.0
    %488 = vmatprep.subr.mxu0 0.0
    %489 = vmatpush2.msra.mxu0 0.0
    %490 = vmatprep.mubr.f32.mxu0 0.0
    %491 = vmatmul.mubr.f32.gmra.mxu0 %v421
    %v492 = vpop.f32.mrf.mxu0
    %v493 = vadd.f32 %v418, %v492
    %v494 = vpop.f32.mrf.mxu0
    %495 = vmatprep.mubr.f32.mxu0 0.0
    %496 = vmatmul.mubr.f32.gmra.mxu0 %v424
    %v497 = vpop.f32.mrf.mxu0
    %v498 = vadd.f32 %v418, %v497
    %v499 = vpop.f32.mrf.mxu0
    %500 = vdwg.mxu0
    %501 = vst.msk [vmem:[#allocation11] sm:$0xff] %vm111, %v493
    %502 = vst.msk [vmem:[#allocation11 + $0x8] sm:$0xff] %vm111, %v498
    // Predicated region
    $region54: #{tpu_custom_call.1} parent=1 // pred_check
      _
    $region55: #{tpu_custom_call.1} parent=1 // pred_check_branch
      %504 = sbr.rel (0) target = $region57
    $region56: #{tpu_custom_call.1} parent=1 // pred_region
      %s506 = ssub.s32 256, 256
      %507 = vsyncadd [#allocation4], %s506
      %s508 = sshll.u32 [#allocation11], 4
      %s509 = int_to_ptr.vmem [resolvable:$true] %s508
      %514 = dma.vmem_to_hbm [thread:$0]  %s509, 256, %s8, [#allocation4], 128, 128, 8
    $region57: #{tpu_custom_call.1} parent=1 // pred_fallthru
      _
    // Predicated region
    $region58: #{tpu_custom_call.1} parent=1 // pred_check
      _
    $region59: #{tpu_custom_call.1} parent=1 // pred_check_branch
      %516 = sbr.rel (0) target = $region61
    $region60: #{tpu_custom_call.1} parent=1 // pred_region
      %517 = dma.done [#allocation4], 256
    $region61: #{tpu_custom_call.1} parent=1 // pred_fallthru
      _
    %518 = vsyncpa [#allocation3], 1
    %519 = vsyncpa [#allocation6], 1
    %520 = vsyncpa [#allocation9], 1
    %521 = vsyncpa [#allocation4], 1

</llo_original>
